<compile_context>
chip_gen: v7x
topology: tpu7x:2x2x1
jax: 0.10.0
libtpu: 0.0.40
codegen_flags: <defaults>
</compile_context>

<pallas_src>
import functools

import jax
import jax.numpy as jnp
from jax.experimental import pallas as pl
from jax.experimental.pallas import tpu as pltpu


def _round_up(x, m):
    return ((x + m - 1) // m) * m


def _vmem_capacity_bytes():
    """Physical per-core VMEM (v5e/v6e: 128 MiB, v7x: 64 MiB); conservative fallback."""
    try:
        cap = getattr(pltpu.get_tpu_info(), "vmem_capacity_bytes", None)
        if cap:
            return int(cap)
    except Exception:
        pass
    return 64 * 1024 * 1024


def _patch_embed_kernel(p_ref, w_ref, b_ref, o_ref, acc_ref):
    # p_ref: (tm, tk) bf16 patch rows; w_ref: (tk, tn) bf16 projection; b_ref: (1, tn) f32 bias;
    # acc_ref: (tm, tn) f32 accumulator held across the innermost ("arbitrary") K axis.
    k = pl.program_id(2)

    @pl.when(k == 0)
    def _():
        acc_ref[...] = jnp.zeros_like(acc_ref)

    acc_ref[...] += jnp.dot(p_ref[...], w_ref[...], preferred_element_type=jnp.float32)

    @pl.when(k == pl.num_programs(2) - 1)
    def _():
        o_ref[...] = (acc_ref[...] + b_ref[...]).astype(o_ref.dtype)


@functools.partial(jax.jit, static_argnames=("patch_size",))
def patch_embed(x, weight, bias, *, patch_size):
    """x: (B, C, D, H, W); weight: (E, C, p, p, p); bias: (E,).  Returns (B, num_patches, E)."""
    B, C, D, H, W = x.shape
    p = patch_size
    E = weight.shape[0]
    Dp, Hp, Wp = D // p, H // p, W // p
    num_patches = Dp * Hp * Wp
    K = C * p * p * p
    M = B * num_patches
    out_dtype = x.dtype                    # module contract: keep Conv3d output dtype
    out_size = jnp.dtype(out_dtype).itemsize

    # --- im2col producer (bf16 cast first so the rearrangement moves half the bytes). ---
    # With allow_input_fusion below, XLA may fuse this chain straight into the kernel's
    # input DMA and skip materializing the (M, K) matrix in HBM.
    xb = x.astype(jnp.bfloat16)
    xr = xb.reshape(B, C, Dp, p, Hp, p, Wp, p)
    xr = xr.transpose(0, 2, 4, 6, 1, 3, 5, 7)            # (B, Dp, Hp, Wp, C, p, p, p)
    patches = xr.reshape(M, K)

    # Conv3d weight (E, C, p, p, p) flattened in the same (c, kd, kh, kw) order -> (K, E).
    w_mat = weight.astype(jnp.bfloat16).reshape(E, K).T
    b_mat = bias.astype(jnp.float32).reshape(1, E)

    # --- VMEM budgets derived from the actual chip (v7x: 64 MiB/TC, v5e/v6e: 128 MiB). ---
    vmem_limit = max(16 * 1024 * 1024,
                     min(_vmem_capacity_bytes() * 3 // 4, 96 * 1024 * 1024))
    w_budget = vmem_limit // 3             # double-buffered weight blocks
    p_budget = vmem_limit * 2 // 5         # double-buffered patch blocks
    o_budget = vmem_limit // 4             # double-buffered out blocks + f32 accumulator

    # --- K tiling: un-tiled contraction when small; otherwise tile K and zero-pad so the
    #     K tile always divides K (a ragged K tail would pollute the accumulator). ---
    K_pad = _round_up(K, 128)              # full 128-lane vregs in the contraction
    if K_pad <= 4096:
        tk = K_pad
    else:
        tk = 2048
        K_pad = _round_up(K_pad, tk)
    gk = K_pad // tk

    if K_pad != K:
        patches = jnp.pad(patches, ((0, 0), (0, K_pad - K)))
        w_mat = jnp.pad(w_mat, ((0, K_pad - K), (0, 0)))

    # --- N tiling: keep the whole embedding dim resident when the weight block fits. ---
    if E <= 256 or 2 * (tk * E * 2) <= w_budget:
        tn = E
    else:
        tn = 256                           # lane-dense multiple of 128; ragged N tail is masked

    # --- M tiling: scale with K so patch blocks are ~1-2 MiB, amortizing per-step cost. ---
    M_pad8 = _round_up(M, 8)
    tm_by_patches = max(8, p_budget // (2 * tk * 2))
    tm_by_out = max(8, o_budget // (tn * (2 * out_size + 4)))
    tm = min(1024, tm_by_patches, tm_by_out, M_pad8)
    tm = max(8, (tm // 8) * 8)
    # v7x has 2 TensorCores: guarantee the parallel axes have >= 2 tiles to shard across them.
    if pl.cdiv(M, tm) == 1 and pl.cdiv(E, tn) == 1 and M > 8:
        tm = max(8, _round_up((M + 1) // 2, 8))

    gm = pl.cdiv(M, tm)
    gn = pl.cdiv(E, tn)

    # --- Grid order: pick whichever order re-streams fewer HBM bytes.  N-outer keeps the
    #     weight/bias block fixed over the inner M axis but re-reads patches gn times;
    #     M-outer is the reverse. ---
    if (gn - 1) * M <= (gm - 1) * E:
        grid = (gn, gm, gk)
        p_map = lambda j, i, k: (i, k)
        w_map = lambda j, i, k: (k, j)
        b_map = lambda j, i, k: (0, j)
        o_map = lambda j, i, k: (i, j)
    else:
        grid = (gm, gn, gk)
        p_map = lambda i, j, k: (i, k)
        w_map = lambda i, j, k: (k, j)
        b_map = lambda i, j, k: (0, j)
        o_map = lambda i, j, k: (i, j)

    cost = pl.CostEstimate(
        flops=2 * M * K * E,
        transcendentals=0,
        bytes_accessed=M * K_pad * 2 + K_pad * E * 2 + E * 4 + M * E * out_size,
    )

    out = pl.pallas_call(
        _patch_embed_kernel,
        out_shape=jax.ShapeDtypeStruct((M, E), out_dtype),
        grid_spec=pltpu.PrefetchScalarGridSpec(
            num_scalar_prefetch=0,
            grid=grid,
            in_specs=[
                pl.BlockSpec((tm, tk), p_map),   # patches
                pl.BlockSpec((tk, tn), w_map),   # projection weight
                pl.BlockSpec((1, tn), b_map),    # bias
            ],
            out_specs=pl.BlockSpec((tm, tn), o_map),
            scratch_shapes=[pltpu.VMEM((tm, tn), jnp.float32)],
        ),
        compiler_params=pltpu.CompilerParams(
            dimension_semantics=("parallel", "parallel", "arbitrary"),
            vmem_limit_bytes=vmem_limit,
            allow_input_fusion=[True, False, False],
        ),
        cost_estimate=cost,
    )(patches, w_mat, b_mat)

    # (B*num_patches, E) -> (B, num_patches, E)  == proj(x).flatten(2).transpose(1, 2)
    return out.reshape(B, num_patches, E)


def _reference_conv3d(x, weight, bias, patch_size):
    # Pure-JAX f32 reference: strided 3D conv (NCDHW, OIDHW), same semantics as nn.Conv3d.
    out = jax.lax.conv_general_dilated(
        x, weight,
        window_strides=(patch_size,) * 3,
        padding="VALID",
        dimension_numbers=("NCDHW", "OIDHW", "NCDHW"),
    )
    out = out + bias.reshape(1, -1, 1, 1, 1)
    B, E = out.shape[0], out.shape[1]
    return out.reshape(B, E, -1).transpose(0, 2, 1)


if __name__ == "__main__":
    # Small, module-consistent shapes: batch=2, in_chans=1, img=16, patch=8, embed_dim=128.
    B, C, IMG, P, E = 2, 1, 16, 8, 128

    key = jax.random.PRNGKey(0)
    kx, kw, kb = jax.random.split(key, 3)
    x = jax.random.normal(kx, (B, C, IMG, IMG, IMG), dtype=jnp.float32)
    # Deterministic synthetic parameters (Conv3d weight: (E, C, P, P, P), bias: (E,)).
    weight = jax.random.normal(kw, (E, C, P, P, P), dtype=jnp.float32) * 0.02
    bias = jax.random.normal(kb, (E,), dtype=jnp.float32) * 0.02

    out = patch_embed(x, weight, bias, patch_size=P)
    jax.block_until_ready(out)

    ref = _reference_conv3d(x, weight, bias, P)
    assert out.shape == ref.shape == (B, (IMG // P) ** 3, E)
    # bf16 inputs with f32 accumulation: tolerance loosened vs the pure-f32 reference.
    err = float(jnp.max(jnp.abs(out - ref)))
    assert jnp.allclose(out, ref, atol=2e-2, rtol=2e-2), f"max abs err = {err}"

    print("KERNEL_OK")
</pallas_src>

<mosaic_0001>
module attributes {stable_mosaic.version = 11 : i64} {
  func.func @_patch_embed_kernel(%arg0: i32, %arg1: i32, %arg2: i32, %arg3: memref<8x512xbf16, #tpu.memory_space<vmem>>, %arg4: memref<512x128xbf16, #tpu.memory_space<vmem>>, %arg5: memref<1x128xf32, #tpu.memory_space<vmem>>, %arg6: memref<8x128xf32, #tpu.memory_space<vmem>>, %arg7: memref<8x128xf32, #tpu.memory_space<vmem>>) attributes {dimension_semantics = [#tpu.dimension_semantics<parallel>, #tpu.dimension_semantics<parallel>, #tpu.dimension_semantics<arbitrary>], iteration_bounds = array<i64: 1, 2, 1>, scalar_prefetch = 0 : i64, scratch_operands = 1 : i64, tpu.core_type = #tpu.core_type<tc>, window_params = [{transform_indices = @transform_0, window_bounds = array<i64: 8, 512>}, {transform_indices = @transform_1, window_bounds = array<i64: 512, 128>}, {transform_indices = @transform_2, window_bounds = array<i64: 1, 128>}, {transform_indices = @transform_3, window_bounds = array<i64: 8, 128>}]} {
    %c0_i32 = arith.constant 0 : i32
    %0 = arith.cmpi eq, %arg2, %c0_i32 : i32
    %1 = arith.extui %0 : i1 to i32
    %c0_i32_0 = arith.constant 0 : i32
    %2 = arith.cmpi ne, %1, %c0_i32_0 : i32
    scf.if %2 {
      %cst_10 = arith.constant 0.000000e+00 : f32
      %12 = vector.broadcast %cst_10 : f32 to vector<8x128xf32>
      %c0_11 = arith.constant 0 : index
      %c0_12 = arith.constant 0 : index
      %13 = vector.load %arg7[%c0_11, %c0_12] : memref<8x128xf32, #tpu.memory_space<vmem>>, vector<8x128xf32>
      tpu.vector_store %arg7[%c0_11, %c0_12], %12 {strides = array<i32>} : memref<8x128xf32, #tpu.memory_space<vmem>>, vector<8x128xf32>,
    } else {
    }
    %c0 = arith.constant 0 : index
    %c0_1 = arith.constant 0 : index
    %3 = vector.load %arg7[%c0, %c0_1] : memref<8x128xf32, #tpu.memory_space<vmem>>, vector<8x128xf32>
    %c0_2 = arith.constant 0 : index
    %c0_3 = arith.constant 0 : index
    %4 = vector.load %arg3[%c0_2, %c0_3] : memref<8x512xbf16, #tpu.memory_space<vmem>>, vector<8x512xbf16>
    %c0_4 = arith.constant 0 : index
    %c0_5 = arith.constant 0 : index
    %5 = vector.load %arg4[%c0_4, %c0_5] : memref<512x128xbf16, #tpu.memory_space<vmem>>, vector<512x128xbf16>
    %cst = arith.constant dense<0.000000e+00> : vector<8x128xf32>
    %6 = tpu.matmul %4, %5, %cst {dimension_numbers = #tpu.dot_dimension_numbers<[1], [0], [0], [1], [0, 0, 1, 1], [], []>} : vector<8x512xbf16>, vector<512x128xbf16>, vector<8x128xf32> -> vector<8x128xf32>
    %7 = arith.addf %3, %6 : vector<8x128xf32>
    %c0_6 = arith.constant 0 : index
    %c0_7 = arith.constant 0 : index
    %8 = vector.load %arg7[%c0_6, %c0_7] : memref<8x128xf32, #tpu.memory_space<vmem>>, vector<8x128xf32>
    tpu.vector_store %arg7[%c0_6, %c0_7], %7 {strides = array<i32>} : memref<8x128xf32, #tpu.memory_space<vmem>>, vector<8x128xf32>,
    %c0_i32_8 = arith.constant 0 : i32
    %9 = arith.cmpi eq, %arg2, %c0_i32_8 : i32
    %10 = arith.extui %9 : i1 to i32
    %c0_i32_9 = arith.constant 0 : i32
    %11 = arith.cmpi ne, %10, %c0_i32_9 : i32
    scf.if %11 {
      %c0_10 = arith.constant 0 : index
      %c0_11 = arith.constant 0 : index
      %12 = vector.load %arg7[%c0_10, %c0_11] : memref<8x128xf32, #tpu.memory_space<vmem>>, vector<8x128xf32>
      %c0_12 = arith.constant 0 : index
      %c0_13 = arith.constant 0 : index
      %13 = vector.load %arg5[%c0_12, %c0_13] : memref<1x128xf32, #tpu.memory_space<vmem>>, vector<1x128xf32>
      %14 = vector.broadcast %13 : vector<1x128xf32> to vector<8x128xf32>
      %15 = arith.addf %12, %14 : vector<8x128xf32>
      %c0_14 = arith.constant 0 : index
      %c0_15 = arith.constant 0 : index
      %16 = vector.load %arg6[%c0_14, %c0_15] : memref<8x128xf32, #tpu.memory_space<vmem>>, vector<8x128xf32>
      tpu.vector_store %arg6[%c0_14, %c0_15], %15 {strides = array<i32>} : memref<8x128xf32, #tpu.memory_space<vmem>>, vector<8x128xf32>,
    } else {
    }
    return
  }
  func.func @transform_0(%arg0: i32, %arg1: i32, %arg2: i32) -> (i32, i32) {
    %c0_i32 = arith.constant 0 : i32
    return %arg1, %arg2 : i32, i32
  }
  func.func @transform_1(%arg0: i32, %arg1: i32, %arg2: i32) -> (i32, i32) {
    %c0_i32 = arith.constant 0 : i32
    return %arg2, %arg0 : i32, i32
  }
  func.func @transform_2(%arg0: i32, %arg1: i32, %arg2: i32) -> (i32, i32) {
    %c0_i32 = arith.constant 0 : i32
    %c0_i32_0 = arith.constant 0 : i32
    return %c0_i32, %arg0 : i32, i32
  }
  func.func @transform_3(%arg0: i32, %arg1: i32, %arg2: i32) -> (i32, i32) {
    %c0_i32 = arith.constant 0 : i32
    return %arg1, %arg0 : i32, i32
  }
}

</mosaic_0001>

<llo_original>
// kernel: patch_embed.1
$region0: #{patch_embed.1}
  #allocation0 [shape = 'u32[]', space=smem, size = 0x4, offset = 0x4, fixed_abs, tag = 'smem constant byte address 0x4 - core index']
  #allocation1 [shape = 'u32[144,128]{1,0:T(1,128)}', space=vmem, size = 0x12000, scoped, tag = 'internal scratch']
  #allocation2 [shape = 'f32[8,128]{1,0:T(8,128)}', space=vmem, size = 0x1000, scoped, tag = 'scratch operand']
  %s0 = inlined_call_operand.vmem [shape: bf16[16,512], index: 0, kind: input, shape index: {}]
  %s1 = inlined_call_operand.vmem [shape: bf16[512,128], index: 1, kind: input, shape index: {}]
  %s2 = inlined_call_operand.vmem [shape: f32[1,128], index: 2, kind: input, shape index: {}]
  %s3 = inlined_call_operand.hbm [shape: f32[16,128], index: 3, kind: output, shape index: {}]
  %s4 = sld [smem:[#allocation0]]
  $region53: #{patch_embed.1} parent=0
    _
  %s6 = ssub.s32 1, %s4
  %s7 = scalar_select 0, %s6, %s4
  $region1: #{patch_embed.1} parent=0
    #allocation3 [shape = 'u8[8192]{0}', space=vmem, size = 0x2000, scoped, tag = 'output window, operand 0']
    #allocation4 [shape = 's32[2]{0}', space=sflag, size = 0x8, scoped, tag = 'scoped memory for patch_embed.1']
    %8 = vsyncpa [#allocation4], 0
    %s9 = scalar_lea.sflag [#allocation4], 1
    %10 = vsyncpa %s9, 0
    loop: start=0, step=1, limit=4
    $region2: #{patch_embed.1} parent=1 // loop_pre_header
      _
    $region3: #{patch_embed.1} parent=1 // loop_header
      %s12 = sphi 0, %s16
      %p13 = scmp.ge.s32.totalorder %s12, 4
      %s19 = sphi 0, %s38
      %s20 = sphi 0, %s34
      %s21 = sphi 0, %s30
      %s22 = sphi 0, %s19
      %s23 = sphi 0, %s20
      %s24 = sphi 0, %s21
      %s25 = sphi 0, %s22
      %s26 = sphi 0, %s23
      %s27 = sphi 0, %s24
      %s43 = sphi 0, %s45
      %s46 = sphi 0, %s43
      %s47 = sphi 0, %s46
      %s63 = sphi 0, %s47
      %s71 = sphi 0, %s73
      %s74 = sphi 0, %s71
      %s75 = sphi 0, %s74
      %s91 = sphi 0, %s75
      %s97 = sphi 0, %s99
      %s100 = sphi 0, %s97
      %s101 = sphi 0, %s100
      %s117 = sphi 0, %s101
      %s125 = sphi 0, %s127
      %s128 = sphi 0, %s125
      %s129 = sphi 0, %s128
      %s145 = sphi 0, %s129
    $region4: #{patch_embed.1} parent=1 // loop_header_branch
      %15 = sbr.rel (%p13) target = $region8
    $region5: #{patch_embed.1} parent=1 // loop_body
      %s17 = ssub.s32 %s12, 1
      %s18 = ssub.s32 %s12, 2
      %s28 = sadd.s32 1, %s21
      %p29 = scmp.ge.s32.totalorder %s28, 1
      %s30 = scalar_select %p29, 0, %s28
      %s31 = sadd.s32 1, %s20
      %s32 = scalar_select %p29, %s31, %s20
      %p33 = scmp.ge.s32.totalorder %s32, 2
      %s34 = scalar_select %p33, 0, %s32
      %s35 = sadd.s32 1, %s19
      %s36 = scalar_select %p33, %s35, %s19
      %p37 = scmp.ge.s32.totalorder %s36, 1
      %s38 = scalar_select %p37, 0, %s36
      %s39 = ssub.s32 %s20, %s34
      %s40 = ssub.s32 %s21, %s30
      %s41 = sor.u32 %s39, %s40
      %p42 = scmp.eq.s32.totalorder %s41, 0
      %s44 = sadd.s32 %s43, 1
      %s45 = scalar_select %p42, %s43, %s44
      %p48 = pneg %p42
      %p49 = scmp.eq.s32.totalorder %s12, 1
      %p50 = por %p48, %p49
      %p51 = scmp.ne.s32.totalorder %s43, %s46
      %p52 = scmp.eq.s32.totalorder %s12, 0
      %p53 = por %p51, %p52
      %p54 = scmp.ne.s32.totalorder %s43, %s46
      %p55 = scmp.eq.s32.totalorder %s17, 1
      %p56 = por %p54, %p55
      %p57 = scmp.ne.s32.totalorder %s46, %s47
      %p58 = scmp.eq.s32.totalorder %s17, 0
      %p59 = por %p57, %p58
      %p60 = scmp.ne.s32.totalorder %s46, %s47
      %p61 = scmp.eq.s32.totalorder %s18, 1
      %p62 = por %p60, %p61
      %p64 = scmp.ne.s32.totalorder %s47, %s63
      %p65 = scmp.eq.s32.totalorder %s18, 0
      %p66 = por %p64, %p65
      %s67 = ssub.s32 %s21, %s30
      %s68 = ssub.s32 %s19, %s38
      %s69 = sor.u32 %s67, %s68
      %p70 = scmp.eq.s32.totalorder %s69, 0
      %s72 = sadd.s32 %s71, 1
      %s73 = scalar_select %p70, %s71, %s72
      %p76 = pneg %p70
      %p77 = scmp.eq.s32.totalorder %s12, 1
      %p78 = por %p76, %p77
      %p79 = scmp.ne.s32.totalorder %s71, %s74
      %p80 = scmp.eq.s32.totalorder %s12, 0
      %p81 = por %p79, %p80
      %p82 = scmp.ne.s32.totalorder %s71, %s74
      %p83 = scmp.eq.s32.totalorder %s17, 1
      %p84 = por %p82, %p83
      %p85 = scmp.ne.s32.totalorder %s74, %s75
      %p86 = scmp.eq.s32.totalorder %s17, 0
      %p87 = por %p85, %p86
      %p88 = scmp.ne.s32.totalorder %s74, %s75
      %p89 = scmp.eq.s32.totalorder %s18, 1
      %p90 = por %p88, %p89
      %p92 = scmp.ne.s32.totalorder %s75, %s91
      %p93 = scmp.eq.s32.totalorder %s18, 0
      %p94 = por %p92, %p93
      %s95 = ssub.s32 %s19, %s38
      %p96 = scmp.eq.s32.totalorder %s95, 0
      %s98 = sadd.s32 %s97, 1
      %s99 = scalar_select %p96, %s97, %s98
      %p102 = pneg %p96
      %p103 = scmp.eq.s32.totalorder %s12, 1
      %p104 = por %p102, %p103
      %p105 = scmp.ne.s32.totalorder %s97, %s100
      %p106 = scmp.eq.s32.totalorder %s12, 0
      %p107 = por %p105, %p106
      %p108 = scmp.ne.s32.totalorder %s97, %s100
      %p109 = scmp.eq.s32.totalorder %s17, 1
      %p110 = por %p108, %p109
      %p111 = scmp.ne.s32.totalorder %s100, %s101
      %p112 = scmp.eq.s32.totalorder %s17, 0
      %p113 = por %p111, %p112
      %p114 = scmp.ne.s32.totalorder %s100, %s101
      %p115 = scmp.eq.s32.totalorder %s18, 1
      %p116 = por %p114, %p115
      %p118 = scmp.ne.s32.totalorder %s101, %s117
      %p119 = scmp.eq.s32.totalorder %s18, 0
      %p120 = por %p118, %p119
      %s121 = ssub.s32 %s20, %s34
      %s122 = ssub.s32 %s19, %s38
      %s123 = sor.u32 %s121, %s122
      %p124 = scmp.eq.s32.totalorder %s123, 0
      %s126 = sadd.s32 %s125, 1
      %s127 = scalar_select %p124, %s125, %s126
      %p130 = pneg %p124
      %p131 = scmp.eq.s32.totalorder %s12, 1
      %p132 = por %p130, %p131
      %p133 = scmp.ne.s32.totalorder %s125, %s128
      %p134 = scmp.eq.s32.totalorder %s12, 0
      %p135 = por %p133, %p134
      %p136 = scmp.ne.s32.totalorder %s125, %s128
      %p137 = scmp.eq.s32.totalorder %s17, 1
      %p138 = por %p136, %p137
      %p139 = scmp.ne.s32.totalorder %s128, %s129
      %p140 = scmp.eq.s32.totalorder %s17, 0
      %p141 = por %p139, %p140
      %p142 = scmp.ne.s32.totalorder %s128, %s129
      %p143 = scmp.eq.s32.totalorder %s18, 1
      %p144 = por %p142, %p143
      %p146 = scmp.ne.s32.totalorder %s129, %s145
      %p147 = scmp.eq.s32.totalorder %s18, 0
      %p148 = por %p146, %p147
      %p149 = scmp.le.s32.totalorder 1, %s12
      %p150 = scmp.lt.s32.totalorder %s12, 3
      %p151 = pnand %p149, %p150
      %p152 = pneg %p151
      // Predicated region
      $region9: #{patch_embed.1} parent=5 // pred_check
        _
      $region10: #{patch_embed.1} parent=5 // pred_check_branch
        %154 = sbr.rel (%p151) target = $region12
      $region11: #{patch_embed.1} parent=5 // pred_region
        %s155 = ssub.s32 %s12, 1
        // Predicated region
        $region13: #{patch_embed.1} parent=11 // pred_check
          %p156 = pneg %p87
        $region14: #{patch_embed.1} parent=11 // pred_check_branch
          %158 = sbr.rel (%p156) target = $region16
        $region15: #{patch_embed.1} parent=11 // pred_region
          %s159 = smul.u32 64, %s24
          %p160 = scmp.lt.s32.totalorder %s159, 63
          %s161 = scalar_select %p160, %s159, 63
          %p162 = scmp.lt.s32.totalorder %s22, 0
          %s163 = scalar_select %p162, %s22, 0
          %s164 = sadd.s32 %s163, %s161
          %s165 = smul.addr %s164, 4
          %s166 = scalar_lea.vmem %s1, %s165
          %s167 = smul.u32 64, %s24
        $region16: #{patch_embed.1} parent=11 // pred_fallthru
          _
        // Predicated region
        $region17: #{patch_embed.1} parent=11 // pred_check
          %p168 = pneg %p113
        $region18: #{patch_embed.1} parent=11 // pred_check_branch
          %170 = sbr.rel (%p168) target = $region20
        $region19: #{patch_embed.1} parent=11 // pred_region
          %p171 = scmp.lt.s32.totalorder %s22, 0
          %s172 = scalar_select %p171, %s22, 0
          %s173 = scalar_lea.vmem %s2, %s172
        $region20: #{patch_embed.1} parent=11 // pred_fallthru
          _
      $region12: #{patch_embed.1} parent=5 // pred_fallthru
        _
      %p174 = scmp.lt.s32.totalorder %s12, 2
      // Predicated region
      $region21: #{patch_embed.1} parent=5 // pred_check
        %p175 = pneg %p174
      $region22: #{patch_embed.1} parent=5 // pred_check_branch
        %177 = sbr.rel (%p175) target = $region24
      $region23: #{patch_embed.1} parent=5 // pred_region
        // Predicated region
        $region25: #{patch_embed.1} parent=23 // pred_check
          %p178 = pneg %p53
        $region26: #{patch_embed.1} parent=23 // pred_check_branch
          %180 = sbr.rel (%p178) target = $region28
        $region27: #{patch_embed.1} parent=23 // pred_region
          %s181 = smul.u32 4, %s21
          %p182 = scmp.lt.s32.totalorder %s20, 1
          %s183 = scalar_select %p182, %s20, 1
          %p184 = scmp.lt.s32.totalorder %s181, 3
          %s185 = scalar_select %p184, %s181, 3
          %s186 = smul.addr %s183, 4
          %s187 = sadd.s32 %s185, %s186
          %s188 = smul.addr %s187, 4
          %s189 = scalar_lea.vmem %s0, %s188
          %s190 = smul.u32 4, %s21
        $region28: #{patch_embed.1} parent=23 // pred_fallthru
          _
      $region24: #{patch_embed.1} parent=5 // pred_fallthru
        _
      %p191 = scmp.le.s32.totalorder 1, %s12
      %p192 = scmp.lt.s32.totalorder %s12, 3
      %p193 = pnand %p191, %p192
      %p194 = pneg %p193
      // Predicated region
      $region29: #{patch_embed.1} parent=5 // pred_check
        _
      $region30: #{patch_embed.1} parent=5 // pred_check_branch
        %196 = sbr.rel (%p193) target = $region32
      $region31: #{patch_embed.1} parent=5 // pred_region
        %s197 = ssub.s32 %s12, 1
        %s198 = smul.u32 4, %s24
        %p199 = scmp.lt.s32.totalorder %s23, 1
        %s200 = scalar_select %p199, %s23, 1
        %p201 = scmp.lt.s32.totalorder %s198, 3
        %s202 = scalar_select %p201, %s198, 3
        %s203 = smul.addr %s200, 4
        %s204 = sadd.s32 %s202, %s203
        %s205 = smul.addr %s204, 4
        %s206 = scalar_lea.vmem %s0, %s205
        %p207 = pneg %p59
        %p208 = pneg %p56
        %s209 = smul.u32 64, %s24
        %p210 = scmp.lt.s32.totalorder %s209, 63
        %s211 = scalar_select %p210, %s209, 63
        %p212 = scmp.lt.s32.totalorder %s22, 0
        %s213 = scalar_select %p212, %s22, 0
        %s214 = sadd.s32 %s213, %s211
        %s215 = smul.addr %s214, 4
        %s216 = scalar_lea.vmem %s1, %s215
        %p217 = pneg %p87
        %p218 = pneg %p84
        %p219 = scmp.lt.s32.totalorder %s22, 0
        %s220 = scalar_select %p219, %s22, 0
        %s221 = scalar_lea.vmem %s2, %s220
        %p222 = pneg %p113
        %p223 = pneg %p110
        %p224 = pneg %p141
        %p225 = pneg %p138
        %s226 = sand.u32 %s128, 1
        %s227 = scalar_lea.sflag [#allocation4], %s226
        %s228 = sand.u32 %s128, 1
        %s229 = smul.addr %s228, 8
        %s230 = scalar_lea.vmem [#allocation3], %s229
        %s231 = smul.u32 4, %s24
        %p232 = scmp.lt.s32.totalorder %s23, 1
        %s233 = scalar_select %p232, %s23, 1
        %p234 = scmp.lt.s32.totalorder %s231, 3
        %s235 = scalar_select %p234, %s231, 3
        %s236 = smul.addr %s233, 4
        %s237 = sadd.s32 %s235, %s236
        %s238 = smul.addr %s237, 4
        %s239 = scalar_lea.vmem %s0, %s238
        %s240 = smul.u32 4, %s24
        %s241 = smul.u32 64, %s24
        %p242 = scmp.lt.s32.totalorder %s241, 63
        %s243 = scalar_select %p242, %s241, 63
        %p244 = scmp.lt.s32.totalorder %s22, 0
        %s245 = scalar_select %p244, %s22, 0
        %s246 = sadd.s32 %s245, %s243
        %s247 = smul.addr %s246, 4
        %s248 = scalar_lea.vmem %s1, %s247
        %s249 = smul.u32 64, %s24
        %p250 = scmp.lt.s32.totalorder %s22, 0
        %s251 = scalar_select %p250, %s22, 0
        %s252 = scalar_lea.vmem %s2, %s251
        %p254 = scmp.eq.s32.totalorder %s24, 0
        // Predicated region
        $region33: #{patch_embed.1} parent=31 // pred_check
          %p255 = pneg %p254
        $region34: #{patch_embed.1} parent=31 // pred_check_branch
          %257 = sbr.rel (%p255) target = $region36
        $region35: #{patch_embed.1} parent=31 // pred_region
          %258 = vst [vmem:[#allocation2] sm:$0xff] 0.0
        $region36: #{patch_embed.1} parent=31 // pred_fallthru
          _
        %v259 = vld [vmem:[#allocation2] sm:$0xff]
        %v260 = vld [vmem:[%s239] sm:$0xff]
        %v261 = vld [vmem:[%s239 + $0x8] sm:$0xff]
        %v262 = vld [vmem:[%s248] sm:$0xf]
        %v263 = vld [vmem:[%s248 + $0x4] sm:$0xf]
        %v264 = vld [vmem:[%s248 + $0x8] sm:$0xf]
        %v265 = vld [vmem:[%s248 + $0xc] sm:$0xf]
        %v266 = vld [vmem:[%s248 + $0x10] sm:$0xf]
        %v267 = vld [vmem:[%s248 + $0x14] sm:$0xf]
        %v268 = vld [vmem:[%s248 + $0x18] sm:$0xf]
        %v269 = vld [vmem:[%s248 + $0x1c] sm:$0xf]
        %v270 = vld [vmem:[%s248 + $0x20] sm:$0xf]
        %v271 = vld [vmem:[%s248 + $0x24] sm:$0xf]
        %v272 = vld [vmem:[%s248 + $0x28] sm:$0xf]
        %v273 = vld [vmem:[%s248 + $0x2c] sm:$0xf]
        %v274 = vld [vmem:[%s248 + $0x30] sm:$0xf]
        %v275 = vld [vmem:[%s248 + $0x34] sm:$0xf]
        %v276 = vld [vmem:[%s248 + $0x38] sm:$0xf]
        %v277 = vld [vmem:[%s248 + $0x3c] sm:$0xf]
        %v278 = vld [vmem:[%s248 + $0x40] sm:$0xf]
        %v279 = vld [vmem:[%s248 + $0x44] sm:$0xf]
        %v280 = vld [vmem:[%s248 + $0x48] sm:$0xf]
        %v281 = vld [vmem:[%s248 + $0x4c] sm:$0xf]
        %v282 = vld [vmem:[%s248 + $0x50] sm:$0xf]
        %v283 = vld [vmem:[%s248 + $0x54] sm:$0xf]
        %v284 = vld [vmem:[%s248 + $0x58] sm:$0xf]
        %v285 = vld [vmem:[%s248 + $0x5c] sm:$0xf]
        %v286 = vld [vmem:[%s248 + $0x60] sm:$0xf]
        %v287 = vld [vmem:[%s248 + $0x64] sm:$0xf]
        %v288 = vld [vmem:[%s248 + $0x68] sm:$0xf]
        %v289 = vld [vmem:[%s248 + $0x6c] sm:$0xf]
        %v290 = vld [vmem:[%s248 + $0x70] sm:$0xf]
        %v291 = vld [vmem:[%s248 + $0x74] sm:$0xf]
        %v292 = vld [vmem:[%s248 + $0x78] sm:$0xf]
        %v293 = vld [vmem:[%s248 + $0x7c] sm:$0xf]
        %v294 = vld [vmem:[%s248 + $0x80] sm:$0xf]
        %v295 = vld [vmem:[%s248 + $0x84] sm:$0xf]
        %v296 = vld [vmem:[%s248 + $0x88] sm:$0xf]
        %v297 = vld [vmem:[%s248 + $0x8c] sm:$0xf]
        %v298 = vld [vmem:[%s248 + $0x90] sm:$0xf]
        %v299 = vld [vmem:[%s248 + $0x94] sm:$0xf]
        %v300 = vld [vmem:[%s248 + $0x98] sm:$0xf]
        %v301 = vld [vmem:[%s248 + $0x9c] sm:$0xf]
        %v302 = vld [vmem:[%s248 + $0xa0] sm:$0xf]
        %v303 = vld [vmem:[%s248 + $0xa4] sm:$0xf]
        %v304 = vld [vmem:[%s248 + $0xa8] sm:$0xf]
        %v305 = vld [vmem:[%s248 + $0xac] sm:$0xf]
        %v306 = vld [vmem:[%s248 + $0xb0] sm:$0xf]
        %v307 = vld [vmem:[%s248 + $0xb4] sm:$0xf]
        %v308 = vld [vmem:[%s248 + $0xb8] sm:$0xf]
        %v309 = vld [vmem:[%s248 + $0xbc] sm:$0xf]
        %v310 = vld [vmem:[%s248 + $0xc0] sm:$0xf]
        %v311 = vld [vmem:[%s248 + $0xc4] sm:$0xf]
        %v312 = vld [vmem:[%s248 + $0xc8] sm:$0xf]
        %v313 = vld [vmem:[%s248 + $0xcc] sm:$0xf]
        %v314 = vld [vmem:[%s248 + $0xd0] sm:$0xf]
        %v315 = vld [vmem:[%s248 + $0xd4] sm:$0xf]
        %v316 = vld [vmem:[%s248 + $0xd8] sm:$0xf]
        %v317 = vld [vmem:[%s248 + $0xdc] sm:$0xf]
        %v318 = vld [vmem:[%s248 + $0xe0] sm:$0xf]
        %v319 = vld [vmem:[%s248 + $0xe4] sm:$0xf]
        %v320 = vld [vmem:[%s248 + $0xe8] sm:$0xf]
        %v321 = vld [vmem:[%s248 + $0xec] sm:$0xf]
        %v322 = vld [vmem:[%s248 + $0xf0] sm:$0xf]
        %v323 = vld [vmem:[%s248 + $0xf4] sm:$0xf]
        %v324 = vld [vmem:[%s248 + $0xf8] sm:$0xf]
        %v325 = vld [vmem:[%s248 + $0xfc] sm:$0xf]
        %v328 = vunpack.c.l.b16 %v260
        %v329 = vunpack.c.h.b16 %v260
        %v330 = vunpack.c.l.b16 %v261
        %v331 = vunpack.c.h.b16 %v261
        %v332 = vpack.c.b16 %v328, %v328
        %v333 = vpack.c.b16 %v329, %v329
        %v334 = vpack.c.b16 %v330, %v330
        %v335 = vpack.c.b16 %v331, %v331
        %v404 = vunpack.c.l.b16 %v262
        %v405 = vunpack.c.l.b16 %v263
        %v406 = vunpack.c.l.b16 %v264
        %v407 = vunpack.c.l.b16 %v265
        %v408 = vunpack.c.l.b16 %v266
        %v409 = vunpack.c.l.b16 %v267
        %v410 = vunpack.c.l.b16 %v268
        %v411 = vunpack.c.l.b16 %v269
        %v412 = vunpack.c.l.b16 %v270
        %v413 = vunpack.c.l.b16 %v271
        %v414 = vunpack.c.l.b16 %v272
        %v415 = vunpack.c.l.b16 %v273
        %v416 = vunpack.c.l.b16 %v274
        %v417 = vunpack.c.l.b16 %v275
        %v418 = vunpack.c.l.b16 %v276
        %v419 = vunpack.c.l.b16 %v277
        %v420 = vunpack.c.l.b16 %v278
        %v421 = vunpack.c.l.b16 %v279
        %v422 = vunpack.c.l.b16 %v280
        %v423 = vunpack.c.l.b16 %v281
        %v424 = vunpack.c.l.b16 %v282
        %v425 = vunpack.c.l.b16 %v283
        %v426 = vunpack.c.l.b16 %v284
        %v427 = vunpack.c.l.b16 %v285
        %v428 = vunpack.c.l.b16 %v286
        %v429 = vunpack.c.l.b16 %v287
        %v430 = vunpack.c.l.b16 %v288
        %v431 = vunpack.c.l.b16 %v289
        %v432 = vunpack.c.l.b16 %v290
        %v433 = vunpack.c.l.b16 %v291
        %v434 = vunpack.c.l.b16 %v292
        %v435 = vunpack.c.l.b16 %v293
        %v436 = vunpack.c.l.b16 %v294
        %v437 = vunpack.c.l.b16 %v295
        %v438 = vunpack.c.l.b16 %v296
        %v439 = vunpack.c.l.b16 %v297
        %v440 = vunpack.c.l.b16 %v298
        %v441 = vunpack.c.l.b16 %v299
        %v442 = vunpack.c.l.b16 %v300
        %v443 = vunpack.c.l.b16 %v301
        %v444 = vunpack.c.l.b16 %v302
        %v445 = vunpack.c.l.b16 %v303
        %v446 = vunpack.c.l.b16 %v304
        %v447 = vunpack.c.l.b16 %v305
        %v448 = vunpack.c.l.b16 %v306
        %v449 = vunpack.c.l.b16 %v307
        %v450 = vunpack.c.l.b16 %v308
        %v451 = vunpack.c.l.b16 %v309
        %v452 = vunpack.c.l.b16 %v310
        %v453 = vunpack.c.l.b16 %v311
        %v454 = vunpack.c.l.b16 %v312
        %v455 = vunpack.c.l.b16 %v313
        %v456 = vunpack.c.l.b16 %v314
        %v457 = vunpack.c.l.b16 %v315
        %v458 = vunpack.c.l.b16 %v316
        %v459 = vunpack.c.l.b16 %v317
        %v460 = vunpack.c.l.b16 %v318
        %v461 = vunpack.c.l.b16 %v319
        %v462 = vunpack.c.l.b16 %v320
        %v463 = vunpack.c.l.b16 %v321
        %v464 = vunpack.c.l.b16 %v322
        %v465 = vunpack.c.l.b16 %v323
        %v466 = vunpack.c.l.b16 %v324
        %v467 = vunpack.c.l.b16 %v325
        %v468 = vpack.c.b16 %v405, %v404
        %v469 = vpack.c.b16 %v407, %v406
        %v470 = vpack.c.b16 %v409, %v408
        %v471 = vpack.c.b16 %v411, %v410
        %v472 = vpack.c.b16 %v413, %v412
        %v473 = vpack.c.b16 %v415, %v414
        %v474 = vpack.c.b16 %v417, %v416
        %v475 = vpack.c.b16 %v419, %v418
        %v476 = vpack.c.b16 %v421, %v420
        %v477 = vpack.c.b16 %v423, %v422
        %v478 = vpack.c.b16 %v425, %v424
        %v479 = vpack.c.b16 %v427, %v426
        %v480 = vpack.c.b16 %v429, %v428
        %v481 = vpack.c.b16 %v431, %v430
        %v482 = vpack.c.b16 %v433, %v432
        %v483 = vpack.c.b16 %v435, %v434
        %v484 = vpack.c.b16 %v437, %v436
        %v485 = vpack.c.b16 %v439, %v438
        %v486 = vpack.c.b16 %v441, %v440
        %v487 = vpack.c.b16 %v443, %v442
        %v488 = vpack.c.b16 %v445, %v444
        %v489 = vpack.c.b16 %v447, %v446
        %v490 = vpack.c.b16 %v449, %v448
        %v491 = vpack.c.b16 %v451, %v450
        %v492 = vpack.c.b16 %v453, %v452
        %v493 = vpack.c.b16 %v455, %v454
        %v494 = vpack.c.b16 %v457, %v456
        %v495 = vpack.c.b16 %v459, %v458
        %v496 = vpack.c.b16 %v461, %v460
        %v497 = vpack.c.b16 %v463, %v462
        %v498 = vpack.c.b16 %v465, %v464
        %v499 = vpack.c.b16 %v467, %v466
        %532 = vmatprep.subr.bf16.mxu0 0
        %533 = vmatpush1.bf16.msra.mxu0 %v468
        %534 = vmatprep.subr.bf16.mxu0 0
        %535 = vmatpush1.bf16.msra.mxu0 %v469
        %536 = vmatprep.subr.bf16.mxu0 0
        %537 = vmatpush1.bf16.msra.mxu0 %v470
        %538 = vmatprep.subr.bf16.mxu0 0
        %539 = vmatpush1.bf16.msra.mxu0 %v471
        %540 = vmatprep.subr.bf16.mxu0 0
        %541 = vmatpush1.bf16.msra.mxu0 %v472
        %542 = vmatprep.subr.bf16.mxu0 0
        %543 = vmatpush1.bf16.msra.mxu0 %v473
        %544 = vmatprep.subr.bf16.mxu0 0
        %545 = vmatpush1.bf16.msra.mxu0 %v474
        %546 = vmatprep.subr.bf16.mxu0 0
        %547 = vmatpush1.bf16.msra.mxu0 %v475
        %548 = vmatprep.subr.bf16.mxu0 0
        %549 = vmatpush1.bf16.msra.mxu0 %v476
        %550 = vmatprep.subr.bf16.mxu0 0
        %551 = vmatpush1.bf16.msra.mxu0 %v477
        %552 = vmatprep.subr.bf16.mxu0 0
        %553 = vmatpush1.bf16.msra.mxu0 %v478
        %554 = vmatprep.subr.bf16.mxu0 0
        %555 = vmatpush1.bf16.msra.mxu0 %v479
        %556 = vmatprep.subr.bf16.mxu0 0
        %557 = vmatpush1.bf16.msra.mxu0 %v480
        %558 = vmatprep.subr.bf16.mxu0 0
        %559 = vmatpush1.bf16.msra.mxu0 %v481
        %560 = vmatprep.subr.bf16.mxu0 0
        %561 = vmatpush1.bf16.msra.mxu0 %v482
        %562 = vmatprep.subr.bf16.mxu0 0
        %563 = vmatpush1.bf16.msra.mxu0 %v483
        %564 = vmatprep.mubr.bf16.mxu0 %v333
        %565 = vmatmul.mubr.bf16.gmra.mrb[0].mxu0 %v332
        %v566 = vpop.f32.mrb[0].mxu0
        %v567 = vadd.f32 0.0, %v566
        %v568 = vpop.f32.mrb[0].mxu0
        %v569 = vpop.f32.mrb[0].mxu0
        %v570 = vpop.f32.mrb[0].mxu0
        %571 = vdwg.mxu0
        %572 = vmatprep.subr.bf16.mxu0 0
        %573 = vmatpush1.bf16.msra.mxu0 %v484
        %574 = vmatprep.subr.bf16.mxu0 0
        %575 = vmatpush1.bf16.msra.mxu0 %v485
        %576 = vmatprep.subr.bf16.mxu0 0
        %577 = vmatpush1.bf16.msra.mxu0 %v486
        %578 = vmatprep.subr.bf16.mxu0 0
        %579 = vmatpush1.bf16.msra.mxu0 %v487
        %580 = vmatprep.subr.bf16.mxu0 0
        %581 = vmatpush1.bf16.msra.mxu0 %v488
        %582 = vmatprep.subr.bf16.mxu0 0
        %583 = vmatpush1.bf16.msra.mxu0 %v489
        %584 = vmatprep.subr.bf16.mxu0 0
        %585 = vmatpush1.bf16.msra.mxu0 %v490
        %586 = vmatprep.subr.bf16.mxu0 0
        %587 = vmatpush1.bf16.msra.mxu0 %v491
        %588 = vmatprep.subr.bf16.mxu0 0
        %589 = vmatpush1.bf16.msra.mxu0 %v492
        %590 = vmatprep.subr.bf16.mxu0 0
        %591 = vmatpush1.bf16.msra.mxu0 %v493
        %592 = vmatprep.subr.bf16.mxu0 0
        %593 = vmatpush1.bf16.msra.mxu0 %v494
        %594 = vmatprep.subr.bf16.mxu0 0
        %595 = vmatpush1.bf16.msra.mxu0 %v495
        %596 = vmatprep.subr.bf16.mxu0 0
        %597 = vmatpush1.bf16.msra.mxu0 %v496
        %598 = vmatprep.subr.bf16.mxu0 0
        %599 = vmatpush1.bf16.msra.mxu0 %v497
        %600 = vmatprep.subr.bf16.mxu0 0
        %601 = vmatpush1.bf16.msra.mxu0 %v498
        %602 = vmatprep.subr.bf16.mxu0 0
        %603 = vmatpush1.bf16.msra.mxu0 %v499
        %604 = vmatprep.mubr.bf16.mxu0 %v335
        %605 = vmatmul.mubr.bf16.gmra.mrb[0].mxu0 %v334
        %v606 = vpop.f32.mrb[0].mxu0
        %v607 = vadd.f32 %v567, %v606
        %v608 = vpop.f32.mrb[0].mxu0
        %v609 = vpop.f32.mrb[0].mxu0
        %v610 = vpop.f32.mrb[0].mxu0
        %611 = vdwg.mxu0
        %v612 = vadd.f32 %v259, %v607
        %613 = vst [vmem:[#allocation2] sm:$0xff] %v612
        // Predicated region
        $region37: #{patch_embed.1} parent=31 // pred_check
          %p614 = pneg %p254
        $region38: #{patch_embed.1} parent=31 // pred_check_branch
          %616 = sbr.rel (%p614) target = $region40
        $region39: #{patch_embed.1} parent=31 // pred_region
          %v617 = vld [vmem:[#allocation2] sm:$0xff]
          %v618 = vld [vmem:[%s252] sm:$0x1]
          %v620 = vlaneseq
          %v621 = vshrl.u32 %v620, 7
          %v622 = vsub.s32 0, %v621
          %v623 = vrot.slane %v618, %v622
          %v625 = vadd.f32 %v617, %v623
          %626 = vst [vmem:[%s230] sm:$0xff] %v625
        $region40: #{patch_embed.1} parent=31 // pred_fallthru
          _
        %s627 = sand.u32 %s128, 1
        %s628 = scalar_lea.sflag [#allocation4], %s627
        %s629 = sand.u32 %s128, 1
        %s630 = smul.addr %s629, 8
        %s631 = scalar_lea.vmem [#allocation3], %s630
        // Predicated region
        $region41: #{patch_embed.1} parent=31 // pred_check
          %p632 = pneg %p138
        $region42: #{patch_embed.1} parent=31 // pred_check_branch
          %634 = sbr.rel (%p632) target = $region44
        $region43: #{patch_embed.1} parent=31 // pred_region
          %s636 = ssub.s32 128, 128
          %637 = vsyncadd %s628, %s636
          %s638 = sadd.s32 %s22, %s23
          %s639 = smul.addr %s638, 128
          %s640 = scalar_lea.hbm %s3, %s639
          %s642 = sshll.u32 %s631, 4
          %s643 = int_to_ptr.vmem [resolvable:$true] %s642
          %645 = dma.vmem_to_hbm [thread:$0]  %s643, 128, %s640, %s628
        $region44: #{patch_embed.1} parent=31 // pred_fallthru
          _
      $region32: #{patch_embed.1} parent=5 // pred_fallthru
        _
      %p646 = scmp.le.s32.totalorder 2, %s12
      // Predicated region
      $region45: #{patch_embed.1} parent=5 // pred_check
        %p647 = pneg %p646
      $region46: #{patch_embed.1} parent=5 // pred_check_branch
        %649 = sbr.rel (%p647) target = $region48
      $region47: #{patch_embed.1} parent=5 // pred_region
        %s650 = ssub.s32 %s12, 2
        // Predicated region
        $region49: #{patch_embed.1} parent=47 // pred_check
          %p651 = pneg %p144
        $region50: #{patch_embed.1} parent=47 // pred_check_branch
          %653 = sbr.rel (%p651) target = $region52
        $region51: #{patch_embed.1} parent=47 // pred_region
          %s654 = sand.u32 %s129, 1
          %s655 = scalar_lea.sflag [#allocation4], %s654
          %s656 = sand.u32 %s129, 1
          %s657 = smul.addr %s656, 8
          %s658 = scalar_lea.vmem [#allocation3], %s657
          %659 = dma.done %s655, 128
        $region52: #{patch_embed.1} parent=47 // pred_fallthru
          _
      $region48: #{patch_embed.1} parent=5 // pred_fallthru
        _
    $region6: #{patch_embed.1} parent=1 // loop_footer
      %s16 = sadd.s32 1, %s12
    $region7: #{patch_embed.1} parent=1 // loop_footer_branch
      %11 = sbr.rel target = $region3
    $region8: #{patch_embed.1} parent=1 // loop_exit
      _
    %660 = vsyncpa [#allocation4], 1
    %s661 = scalar_lea.sflag [#allocation4], 1
    %662 = vsyncpa %s661, 1

</llo_original>
